<compile_context>
chip_gen: v7x
topology: tpu7x:2x2x1
jax: 0.10.0
libtpu: 0.0.40
codegen_flags: <defaults>
</compile_context>

<pallas_src>
import functools

import jax
import jax.numpy as jnp
import numpy as np
from jax.experimental import pallas as pl
from jax.experimental.pallas import tpu as pltpu

_ROW_ALIGN = 32  # int8 cb output packs as (32, 128); also covers f32/bf16 tiling.


def _round_up(v, m):
    return ((v + m - 1) // m) * m


def _gvq_kernel(x_ref, w_ref, b_ref, ent_ref, gsum_ref, gtri_ref,
                q_ref, cb_ref, stats_ref,
                *, G, E, n_valid, n_padded):
    """One grid step processes a (TM, F) tile of rows.

    in refs : x (TM, F), W (F, G*E), b (1, G*E),
              block-diag entries (G*E, G*Dg),
              block-diag all-ones S (G*E, G*E), block-diag lower-tri ones L (G*E, G*E)
    out refs: quantized (TM, G*Dg) f32, cb (TM, G*E) int8,
              stats (1, 2, 8, G*E) per-block 8-sublane partial sums
              (slab 0 = hard one-hot counts, slab 1 = softmax prob sums).
    """
    TM = x_ref.shape[0]
    GE = G * E

    # entry_proj: logits = x @ W + b   (MXU, f32 for argmax parity with the reference)
    logits = jnp.dot(x_ref[...], w_ref[...],
                     preferred_element_type=jnp.float32) + b_ref[...]   # (TM, GE)

    # Static lane -> group map (hoisted once; shift instead of divide for pow-2 E).
    lane = jax.lax.broadcasted_iota(jnp.int32, (TM, GE), 1)
    if E & (E - 1) == 0:
        gid = lane >> (E.bit_length() - 1)
    else:
        gid = lane // E
    masks = [gid == g for g in range(G)]          # hoisted group masks (reused below)

    neg_inf = jnp.float32(-jnp.inf)

    # Per-group max over lanes — the only remaining XLU reduction family.
    mx_full = jnp.zeros((TM, GE), jnp.float32)
    for g in range(G):                            # G is small & static -> unrolled
        m_g = jnp.max(jnp.where(masks[g], logits, neg_inf), axis=-1, keepdims=True)
        mx_full = jnp.where(masks[g], m_g, mx_full)

    # Stable softmax: exp on EUP; per-group denominator via MXU against a constant
    # block-diagonal all-ones matrix (no XLU lane reduce); reciprocal instead of divide.
    ex = jnp.exp(logits - mx_full)                                        # (TM, GE)
    den_full = jnp.dot(ex, gsum_ref[...], preferred_element_type=jnp.float32)
    probs = ex * pl.reciprocal(den_full, approx=False)                    # (TM, GE)

    # First-occurrence argmax one-hot: inclusive per-group prefix count of maxima on
    # the MXU (exact: 0/1 products, integer counts <= E), then select count == 1.
    is_max = logits == mx_full
    cum = jnp.dot(is_max.astype(jnp.float32), gtri_ref[...],
                  preferred_element_type=jnp.float32)
    sel = is_max & (cum == 1.0)
    hard = sel.astype(jnp.float32)                                        # (TM, GE)

    # Outputs: one-hot codes as int8 (exact for 0/1, smallest HBM write stream) and
    # codeword lookup as one lane-full K=GE matmul against block-diagonal entries.
    cb_ref[...] = sel.astype(cb_ref.dtype)
    q_ref[...] = jnp.dot(hard, ent_ref[...],
                         preferred_element_type=jnp.float32).astype(q_ref.dtype)

    # Per-block partial statistics, kept 8-sublane deep (pure VPU adds, no carried
    # scratch -> the row grid axis stays "parallel" / megacore-friendly).
    if n_valid < n_padded:
        row = pl.program_id(0) * TM + jax.lax.broadcasted_iota(jnp.int32, (TM, 1), 0)
        valid = (row < n_valid).astype(jnp.float32)                       # (TM, 1)
        hard_s = hard * valid
        probs_s = probs * valid
    else:
        hard_s, probs_s = hard, probs

    if TM % 64 == 0:
        # Two-level add tree: depth ~ TM//64 + 8 instead of TM//8.
        stats_ref[0, 0, :, :] = hard_s.reshape(TM // 64, 8, 8, GE).sum(axis=1).sum(axis=0)
        stats_ref[0, 1, :, :] = probs_s.reshape(TM // 64, 8, 8, GE).sum(axis=1).sum(axis=0)
    else:
        stats_ref[0, 0, :, :] = hard_s.reshape(TM // 8, 8, GE).sum(axis=0)
        stats_ref[0, 1, :, :] = probs_s.reshape(TM // 8, 8, GE).sum(axis=0)


def gumbel_vq_forward(x, proj_w, proj_b, entries, *,
                      num_codebooks, num_codebook_entries, tm=1024,
                      cb_dtype=jnp.int8):
    """x: (B, T, F) f32. proj_w: (F, G*E). proj_b: (G*E,). entries: (G*E, Dg)."""
    B, T, F = x.shape
    N = B * T
    G, E = num_codebooks, num_codebook_entries
    GE = G * E
    Dg = entries.shape[-1]
    Dq = G * Dg

    # Row tile: multiple of 32 (int8 packing), capped at 4096 (VMEM on v7x), and capped
    # so the grid has >= 2 blocks whenever possible (megacore on v7x).
    n_align = _round_up(N, _ROW_ALIGN)
    tm_req = max(_ROW_ALIGN, min(4096, (int(tm) // _ROW_ALIGN) * _ROW_ALIGN))
    if n_align >= 2 * _ROW_ALIGN:
        tm_half = max(_ROW_ALIGN, _round_up(n_align // 2, _ROW_ALIGN))
    else:
        tm_half = n_align
    tm_eff = min(tm_req, tm_half, n_align)
    n_pad = _round_up(N, tm_eff)
    nb = n_pad // tm_eff

    x2 = x.reshape(N, F).astype(jnp.float32)
    if n_pad != N:
        x2 = jnp.pad(x2, ((0, n_pad - N), (0, 0)))
    b2 = proj_b.reshape(1, GE).astype(jnp.float32)

    # Block-diagonal entries matrix (G*E, G*Dg), built once at trace time.
    ent = entries.reshape(G, E, Dg).astype(jnp.float32)
    ent_bd = jax.scipy.linalg.block_diag(*[ent[g] for g in range(G)])

    # Constant block-diagonal helper matrices (host-side numpy constants):
    #   S: per-group all-ones (segmented lane sum on the MXU)
    #   L: per-group lower-triangular ones, L[j, i] = 1 iff j <= i (inclusive prefix count)
    eye_g = np.eye(G, dtype=np.float32)
    gsum_bd = jnp.asarray(np.kron(eye_g, np.ones((E, E), np.float32)))
    gtri_bd = jnp.asarray(np.kron(eye_g, np.triu(np.ones((E, E), np.float32))))

    kernel = functools.partial(_gvq_kernel, G=G, E=E, n_valid=N, n_padded=n_pad)

    q, cb, stats = pl.pallas_call(
        kernel,
        out_shape=(
            jax.ShapeDtypeStruct((n_pad, Dq), jnp.float32),     # quantized (flat)
            jax.ShapeDtypeStruct((n_pad, GE), cb_dtype),        # cb (one-hot codes)
            jax.ShapeDtypeStruct((nb, 2, 8, GE), jnp.float32),  # per-block stat partials
        ),
        grid_spec=pltpu.PrefetchScalarGridSpec(
            num_scalar_prefetch=0,
            grid=(nb,),
            in_specs=[
                pl.BlockSpec((tm_eff, F), lambda i: (i, 0)),
                pl.BlockSpec((F, GE), lambda i: (0, 0)),
                pl.BlockSpec((1, GE), lambda i: (0, 0)),
                pl.BlockSpec((GE, Dq), lambda i: (0, 0)),
                pl.BlockSpec((GE, GE), lambda i: (0, 0)),
                pl.BlockSpec((GE, GE), lambda i: (0, 0)),
            ],
            out_specs=[
                pl.BlockSpec((tm_eff, Dq), lambda i: (i, 0)),
                pl.BlockSpec((tm_eff, GE), lambda i: (i, 0)),
                pl.BlockSpec((1, 2, 8, GE), lambda i: (i, 0, 0, 0)),
            ],
        ),
        compiler_params=pltpu.CompilerParams(
            dimension_semantics=("parallel",),      # no carried state -> megacore-friendly
            vmem_limit_bytes=32 * 1024 * 1024,
        ),
    )(x2, proj_w.astype(jnp.float32), b2, ent_bd, gsum_bd, gtri_bd)

    # Tiny final reductions + entropy math in plain JAX (outside the kernel).
    hard_counts = stats[:, 0].sum(axis=(0, 1))                  # (GE,)
    soft_sums = stats[:, 1].sum(axis=(0, 1))                    # (GE,)
    hard_probs = (hard_counts / N).reshape(G, E)
    code_ppl = jnp.exp(-jnp.sum(hard_probs * jnp.log(hard_probs + 1e-7), axis=-1)).sum()
    avg_probs = (soft_sums / N).reshape(G, E)
    prob_ppl = jnp.exp(-jnp.sum(avg_probs * jnp.log(avg_probs + 1e-7), axis=-1)).sum()

    quantized = q[:N].reshape(B, T, Dq)
    cb_out = cb[:N]                                             # int8 (0/1 exact)
    return quantized, cb_out, code_ppl, prob_ppl


def _reference_forward(x, proj_w, proj_b, entries, *, G, E):
    """Pure-JAX reference mirroring the PyTorch eval-mode forward."""
    B, T, F = x.shape
    N = B * T
    Dg = entries.shape[-1]
    logits = x.reshape(N, F) @ proj_w + proj_b                   # (N, G*E)
    lg = logits.reshape(N, G, E)
    k = jnp.argmax(lg, axis=-1)
    hard = jax.nn.one_hot(k, E, dtype=jnp.float32)               # (N, G, E)
    hard_probs = hard.mean(axis=0)
    code_ppl = jnp.exp(-jnp.sum(hard_probs * jnp.log(hard_probs + 1e-7), -1)).sum()
    avg_probs = jax.nn.softmax(lg, axis=-1).mean(axis=0)
    prob_ppl = jnp.exp(-jnp.sum(avg_probs * jnp.log(avg_probs + 1e-7), -1)).sum()
    cb = hard.reshape(N, G * E)
    ent = entries.reshape(G, E, Dg)
    quantized = jnp.einsum('nge,ged->ngd', hard, ent).reshape(B, T, G * Dg)
    return quantized, cb, code_ppl, prob_ppl


def _check_case(key, B, T, input_dim, num_codebooks, num_codebook_entries,
                entry_dim, tm):
    kx, kw, ke = jax.random.split(key, 3)
    num_total_entries = num_codebooks * num_codebook_entries

    # Deterministic parameter init matching the module's reset logic:
    #   entry_proj.weight ~ N(0, 1), bias = 0 ; entries ~ U[0, 1)
    x = jax.random.normal(kx, (B, T, input_dim), dtype=jnp.float32)
    proj_w = jax.random.normal(kw, (input_dim, num_total_entries), dtype=jnp.float32)
    proj_b = jnp.zeros((num_total_entries,), dtype=jnp.float32)
    entries = jax.random.uniform(ke, (num_total_entries, entry_dim), dtype=jnp.float32)

    quantized, cb, code_ppl, prob_ppl = jax.block_until_ready(
        gumbel_vq_forward(x, proj_w, proj_b, entries,
                          num_codebooks=num_codebooks,
                          num_codebook_entries=num_codebook_entries, tm=tm))

    q_ref, cb_ref, cppl_ref, pppl_ref = _reference_forward(
        x, proj_w, proj_b, entries, G=num_codebooks, E=num_codebook_entries)

    np.testing.assert_allclose(np.asarray(quantized), np.asarray(q_ref),
                               rtol=1e-5, atol=1e-5)
    np.testing.assert_allclose(np.asarray(cb.astype(jnp.float32)),
                               np.asarray(cb_ref), rtol=0, atol=0)
    np.testing.assert_allclose(float(code_ppl), float(cppl_ref), rtol=1e-5)
    # Softmax denominator now goes through the MXU f32 path; allow a slightly
    # looser tolerance on the soft statistic only.
    np.testing.assert_allclose(float(prob_ppl), float(pppl_ref), rtol=1e-4)
    return prob_ppl


if __name__ == "__main__":
    # Module config (small, consistent with the PyTorch __init__ constraints):
    input_dim = 32
    output_dim = 32
    num_codebooks = 2            # G
    num_codebook_entries = 64    # E
    entry_dim = output_dim // num_codebooks                   # 16
    num_total_entries = num_codebooks * num_codebook_entries  # 128
    max_temp, min_temp, temp_decay = 2.0, 0.5, 0.999995

    key = jax.random.PRNGKey(0)
    k1, k2 = jax.random.split(key)

    # Case 1: the canonical small shape (single grid block).
    prob_ppl = _check_case(k1, B=2, T=8, input_dim=input_dim,
                           num_codebooks=num_codebooks,
                           num_codebook_entries=num_codebook_entries,
                           entry_dim=entry_dim, tm=1024)

    # Case 2: multi-block grid with row padding + masking (N=150, tm=64).
    _check_case(k2, B=3, T=50, input_dim=input_dim,
                num_codebooks=num_codebooks,
                num_codebook_entries=num_codebook_entries,
                entry_dim=entry_dim, tm=64)

    # current temperature (num_updates == 0, eval mode -> not incremented)
    num_updates = 0
    current_temp = max(max_temp * (temp_decay ** num_updates), min_temp)
    # module loss: (num_entries - prob_perplexity) / num_entries
    loss = (num_total_entries - prob_ppl) / num_total_entries
    _ = float(loss), float(current_temp)

    print("KERNEL_OK")
</pallas_src>

<mosaic_0001>
module attributes {stable_mosaic.version = 11 : i64} {
  func.func @_gvq_kernel(%arg0: i32, %arg1: memref<32x32xf32, #tpu.memory_space<vmem>>, %arg2: memref<32x128xf32, #tpu.memory_space<vmem>>, %arg3: memref<1x128xf32, #tpu.memory_space<vmem>>, %arg4: memref<128x32xf32, #tpu.memory_space<vmem>>, %arg5: memref<128x128xf32, #tpu.memory_space<vmem>>, %arg6: memref<128x128xf32, #tpu.memory_space<vmem>>, %arg7: memref<32x32xf32, #tpu.memory_space<vmem>>, %arg8: memref<32x128xi8, #tpu.memory_space<vmem>>, %arg9: memref<1x2x8x128xf32, #tpu.memory_space<vmem>>) attributes {dimension_semantics = [#tpu.dimension_semantics<parallel>], iteration_bounds = array<i64: 1>, scalar_prefetch = 0 : i64, scratch_operands = 0 : i64, tpu.core_type = #tpu.core_type<tc>, window_params = [{transform_indices = @transform_0, window_bounds = array<i64: 32, 32>}, {pipeline_mode = #tpu.pipeline_mode<synchronous>, transform_indices = @transform_1, window_bounds = array<i64: 32, 128>}, {pipeline_mode = #tpu.pipeline_mode<synchronous>, transform_indices = @transform_2, window_bounds = array<i64: 1, 128>}, {pipeline_mode = #tpu.pipeline_mode<synchronous>, transform_indices = @transform_3, window_bounds = array<i64: 128, 32>}, {pipeline_mode = #tpu.pipeline_mode<synchronous>, transform_indices = @transform_4, window_bounds = array<i64: 128, 128>}, {pipeline_mode = #tpu.pipeline_mode<synchronous>, transform_indices = @transform_5, window_bounds = array<i64: 128, 128>}, {transform_indices = @transform_6, window_bounds = array<i64: 32, 32>}, {transform_indices = @transform_7, window_bounds = array<i64: 32, 128>}, {transform_indices = @transform_8, window_bounds = array<i64: 1, 2, 8, 128>}]} {
    %c0 = arith.constant 0 : index
    %c0_0 = arith.constant 0 : index
    %0 = vector.load %arg1[%c0, %c0_0] : memref<32x32xf32, #tpu.memory_space<vmem>>, vector<32x32xf32>
    %c0_1 = arith.constant 0 : index
    %c0_2 = arith.constant 0 : index
    %1 = vector.load %arg2[%c0_1, %c0_2] : memref<32x128xf32, #tpu.memory_space<vmem>>, vector<32x128xf32>
    %cst = arith.constant dense<0.000000e+00> : vector<32x128xf32>
    %2 = tpu.matmul %0, %1, %cst {dimension_numbers = #tpu.dot_dimension_numbers<[1], [0], [0], [1], [0, 0, 1, 1], [], []>} : vector<32x32xf32>, vector<32x128xf32>, vector<32x128xf32> -> vector<32x128xf32>
    %c0_3 = arith.constant 0 : index
    %c0_4 = arith.constant 0 : index
    %3 = vector.load %arg3[%c0_3, %c0_4] : memref<1x128xf32, #tpu.memory_space<vmem>>, vector<1x128xf32>
    %4 = vector.broadcast %3 : vector<1x128xf32> to vector<32x128xf32>
    %5 = arith.addf %2, %4 : vector<32x128xf32>
    %6 = tpu.iota {dimensions = array<i32: 1>} : vector<32x128xi32>
    %c6_i32 = arith.constant 6 : i32
    %7 = vector.broadcast %c6_i32 : i32 to vector<32x128xi32>
    %8 = arith.shrsi %6, %7 : vector<32x128xi32>
    %c0_i32 = arith.constant 0 : i32
    %9 = vector.broadcast %c0_i32 : i32 to vector<32x128xi32>
    %10 = arith.cmpi eq, %8, %9 : vector<32x128xi32>
    %c1_i32 = arith.constant 1 : i32
    %11 = vector.broadcast %c1_i32 : i32 to vector<32x128xi32>
    %12 = arith.cmpi eq, %8, %11 : vector<32x128xi32>
    %cst_5 = arith.constant 0.000000e+00 : f32
    %13 = vector.broadcast %cst_5 : f32 to vector<32x128xf32>
    %cst_6 = arith.constant 0xFF800000 : f32
    %14 = vector.broadcast %cst_6 : f32 to vector<32x128xf32>
    %15 = arith.select %10, %5, %14 : vector<32x128xi1>, vector<32x128xf32>
    %cst_7 = arith.constant dense<0xFF800000> : vector<32xf32>
    %16 = vector.multi_reduction <maximumf>, %15, %cst_7 [1] : vector<32x128xf32> to vector<32xf32>
    %17 = vector.shape_cast %16 : vector<32xf32> to vector<32x1xf32>
    %18 = vector.shape_cast %17 : vector<32x1xf32> to vector<32x1xf32>
    %19 = vector.broadcast %18 : vector<32x1xf32> to vector<32x128xf32>
    %20 = arith.select %10, %19, %13 : vector<32x128xi1>, vector<32x128xf32>
    %cst_8 = arith.constant 0xFF800000 : f32
    %21 = vector.broadcast %cst_8 : f32 to vector<32x128xf32>
    %22 = arith.select %12, %5, %21 : vector<32x128xi1>, vector<32x128xf32>
    %cst_9 = arith.constant dense<0xFF800000> : vector<32xf32>
    %23 = vector.multi_reduction <maximumf>, %22, %cst_9 [1] : vector<32x128xf32> to vector<32xf32>
    %24 = vector.shape_cast %23 : vector<32xf32> to vector<32x1xf32>
    %25 = vector.shape_cast %24 : vector<32x1xf32> to vector<32x1xf32>
    %26 = vector.broadcast %25 : vector<32x1xf32> to vector<32x128xf32>
    %27 = arith.select %12, %26, %20 : vector<32x128xi1>, vector<32x128xf32>
    %28 = arith.subf %5, %27 : vector<32x128xf32>
    %29 = math.exp %28 : vector<32x128xf32>
    %c0_10 = arith.constant 0 : index
    %c0_11 = arith.constant 0 : index
    %30 = vector.load %arg5[%c0_10, %c0_11] : memref<128x128xf32, #tpu.memory_space<vmem>>, vector<128x128xf32>
    %cst_12 = arith.constant dense<0.000000e+00> : vector<32x128xf32>
    %31 = tpu.matmul %29, %30, %cst_12 {dimension_numbers = #tpu.dot_dimension_numbers<[1], [0], [0], [1], [0, 0, 1, 1], [], []>} : vector<32x128xf32>, vector<128x128xf32>, vector<32x128xf32> -> vector<32x128xf32>
    %32 = tpu.reciprocal %31 : vector<32x128xf32> -> vector<32x128xf32>
    %33 = arith.mulf %29, %32 : vector<32x128xf32>
    %34 = arith.cmpf oeq, %5, %27 : vector<32x128xf32>
    %35 = arith.extui %34 : vector<32x128xi1> to vector<32x128xi32>
    %36 = arith.sitofp %35 : vector<32x128xi32> to vector<32x128xf32>
    %c0_13 = arith.constant 0 : index
    %c0_14 = arith.constant 0 : index
    %37 = vector.load %arg6[%c0_13, %c0_14] : memref<128x128xf32, #tpu.memory_space<vmem>>, vector<128x128xf32>
    %cst_15 = arith.constant dense<0.000000e+00> : vector<32x128xf32>
    %38 = tpu.matmul %36, %37, %cst_15 {dimension_numbers = #tpu.dot_dimension_numbers<[1], [0], [0], [1], [0, 0, 1, 1], [], []>} : vector<32x128xf32>, vector<128x128xf32>, vector<32x128xf32> -> vector<32x128xf32>
    %cst_16 = arith.constant 1.000000e+00 : f32
    %39 = vector.broadcast %cst_16 : f32 to vector<32x128xf32>
    %40 = arith.cmpf oeq, %38, %39 : vector<32x128xf32>
    %41 = arith.andi %34, %40 : vector<32x128xi1>
    %42 = arith.extui %41 : vector<32x128xi1> to vector<32x128xi32>
    %43 = arith.sitofp %42 : vector<32x128xi32> to vector<32x128xf32>
    %44 = arith.extui %41 : vector<32x128xi1> to vector<32x128xi8>
    %c0_17 = arith.constant 0 : index
    %c0_18 = arith.constant 0 : index
    %45 = vector.load %arg8[%c0_17, %c0_18] : memref<32x128xi8, #tpu.memory_space<vmem>>, vector<32x128xi8>
    tpu.vector_store %arg8[%c0_17, %c0_18], %44 {strides = array<i32>} : memref<32x128xi8, #tpu.memory_space<vmem>>, vector<32x128xi8>,
    %c0_19 = arith.constant 0 : index
    %c0_20 = arith.constant 0 : index
    %46 = vector.load %arg4[%c0_19, %c0_20] : memref<128x32xf32, #tpu.memory_space<vmem>>, vector<128x32xf32>
    %cst_21 = arith.constant dense<0.000000e+00> : vector<32x32xf32>
    %47 = tpu.matmul %43, %46, %cst_21 {dimension_numbers = #tpu.dot_dimension_numbers<[1], [0], [0], [1], [0, 0, 1, 1], [], []>} : vector<32x128xf32>, vector<128x32xf32>, vector<32x32xf32> -> vector<32x32xf32>
    %c0_22 = arith.constant 0 : index
    %c0_23 = arith.constant 0 : index
    %48 = vector.load %arg7[%c0_22, %c0_23] : memref<32x32xf32, #tpu.memory_space<vmem>>, vector<32x32xf32>
    tpu.vector_store %arg7[%c0_22, %c0_23], %47 {strides = array<i32>} : memref<32x32xf32, #tpu.memory_space<vmem>>, vector<32x32xf32>,
    %c32_i32 = arith.constant 32 : i32
    %49 = arith.muli %arg0, %c32_i32 : i32
    %50 = tpu.iota {dimensions = array<i32: 0>} : vector<32x1xi32>
    %51 = vector.broadcast %49 : i32 to vector<32x1xi32>
    %52 = arith.addi %51, %50 : vector<32x1xi32>
    %c16_i32 = arith.constant 16 : i32
    %53 = vector.broadcast %c16_i32 : i32 to vector<32x1xi32>
    %54 = arith.cmpi slt, %52, %53 : vector<32x1xi32>
    %55 = arith.extui %54 : vector<32x1xi1> to vector<32x1xi32>
    %56 = arith.sitofp %55 : vector<32x1xi32> to vector<32x1xf32>
    %57 = vector.broadcast %56 : vector<32x1xf32> to vector<32x128xf32>
    %58 = arith.mulf %43, %57 : vector<32x128xf32>
    %59 = vector.broadcast %56 : vector<32x1xf32> to vector<32x128xf32>
    %60 = arith.mulf %33, %59 : vector<32x128xf32>
    %61 = vector.shape_cast %58 : vector<32x128xf32> to vector<4x8x128xf32>
    %cst_24 = arith.constant dense<0.000000e+00> : vector<8x128xf32>
    %62 = vector.multi_reduction <add>, %61, %cst_24 [0] : vector<4x8x128xf32> to vector<8x128xf32>
    %c0_25 = arith.constant 0 : index
    %c0_26 = arith.constant 0 : index
    %c0_27 = arith.constant 0 : index
    %c0_28 = arith.constant 0 : index
    %63 = vector.load %arg9[%c0_25, %c0_26, %c0_27, %c0_28] : memref<1x2x8x128xf32, #tpu.memory_space<vmem>>, vector<1x1x8x128xf32>
    %64 = vector.shape_cast %63 : vector<1x1x8x128xf32> to vector<8x128xf32>
    %65 = vector.shape_cast %62 : vector<8x128xf32> to vector<1x1x8x128xf32>
    tpu.vector_store %arg9[%c0_25, %c0_26, %c0_27, %c0_28], %65 {strides = array<i32>} : memref<1x2x8x128xf32, #tpu.memory_space<vmem>>, vector<1x1x8x128xf32>,
    %66 = vector.shape_cast %60 : vector<32x128xf32> to vector<4x8x128xf32>
    %cst_29 = arith.constant dense<0.000000e+00> : vector<8x128xf32>
    %67 = vector.multi_reduction <add>, %66, %cst_29 [0] : vector<4x8x128xf32> to vector<8x128xf32>
    %c0_30 = arith.constant 0 : index
    %c1 = arith.constant 1 : index
    %c0_31 = arith.constant 0 : index
    %c0_32 = arith.constant 0 : index
    %68 = vector.load %arg9[%c0_30, %c1, %c0_31, %c0_32] : memref<1x2x8x128xf32, #tpu.memory_space<vmem>>, vector<1x1x8x128xf32>
    %69 = vector.shape_cast %68 : vector<1x1x8x128xf32> to vector<8x128xf32>
    %70 = vector.shape_cast %67 : vector<8x128xf32> to vector<1x1x8x128xf32>
    tpu.vector_store %arg9[%c0_30, %c1, %c0_31, %c0_32], %70 {strides = array<i32>} : memref<1x2x8x128xf32, #tpu.memory_space<vmem>>, vector<1x1x8x128xf32>,
    return
  }
  func.func @transform_0(%arg0: i32) -> (i32, i32) {
    %c0_i32 = arith.constant 0 : i32
    %c0_i32_0 = arith.constant 0 : i32
    return %arg0, %c0_i32 : i32, i32
  }
  func.func @transform_1(%arg0: i32) -> (i32, i32) {
    %c0_i32 = arith.constant 0 : i32
    %c0_i32_0 = arith.constant 0 : i32
    %c0_i32_1 = arith.constant 0 : i32
    return %c0_i32, %c0_i32_0 : i32, i32
  }
  func.func @transform_2(%arg0: i32) -> (i32, i32) {
    %c0_i32 = arith.constant 0 : i32
    %c0_i32_0 = arith.constant 0 : i32
    %c0_i32_1 = arith.constant 0 : i32
    return %c0_i32, %c0_i32_0 : i32, i32
  }
  func.func @transform_3(%arg0: i32) -> (i32, i32) {
    %c0_i32 = arith.constant 0 : i32
    %c0_i32_0 = arith.constant 0 : i32
    %c0_i32_1 = arith.constant 0 : i32
    return %c0_i32, %c0_i32_0 : i32, i32
  }
  func.func @transform_4(%arg0: i32) -> (i32, i32) {
    %c0_i32 = arith.constant 0 : i32
    %c0_i32_0 = arith.constant 0 : i32
    %c0_i32_1 = arith.constant 0 : i32
    return %c0_i32, %c0_i32_0 : i32, i32
  }
  func.func @transform_5(%arg0: i32) -> (i32, i32) {
    %c0_i32 = arith.constant 0 : i32
    %c0_i32_0 = arith.constant 0 : i32
    %c0_i32_1 = arith.constant 0 : i32
    return %c0_i32, %c0_i32_0 : i32, i32
  }
  func.func @transform_6(%arg0: i32) -> (i32, i32) {
    %c0_i32 = arith.constant 0 : i32
    %c0_i32_0 = arith.constant 0 : i32
    return %arg0, %c0_i32 : i32, i32
  }
  func.func @transform_7(%arg0: i32) -> (i32, i32) {
    %c0_i32 = arith.constant 0 : i32
    %c0_i32_0 = arith.constant 0 : i32
    return %arg0, %c0_i32 : i32, i32
  }
  func.func @transform_8(%arg0: i32) -> (i32, i32, i32, i32) {
    %c0_i32 = arith.constant 0 : i32
    %c0_i32_0 = arith.constant 0 : i32
    %c0_i32_1 = arith.constant 0 : i32
    %c0_i32_2 = arith.constant 0 : i32
    return %arg0, %c0_i32, %c0_i32_0, %c0_i32_1 : i32, i32, i32, i32
  }
}

</mosaic_0001>

<llo_original>
// kernel: tpu_custom_call.1
$region0: #{tpu_custom_call.1}
  #allocation0 [shape = 'u32[]', space=smem, size = 0x4, offset = 0x4, fixed_abs, tag = 'smem constant byte address 0x4 - core index']
  #allocation1 [shape = 'u32[144,128]{1,0:T(1,128)}', space=vmem, size = 0x12000, scoped, tag = 'internal scratch']
  %s0 = inlined_call_operand.vmem [shape: f32[32,32], index: 0, kind: input, shape index: {}]
  %s1 = inlined_call_operand.hbm [shape: f32[32,128], index: 1, kind: input, shape index: {}]
  %s2 = inlined_call_operand.vmem [shape: f32[1,128], index: 2, kind: input, shape index: {}]
  %s3 = inlined_call_operand.vmem [shape: f32[128,32], index: 3, kind: input, shape index: {}]
  %s4 = inlined_call_operand.vmem [shape: f32[128,128], index: 4, kind: input, shape index: {}]
  %s5 = inlined_call_operand.hbm [shape: f32[128,128], index: 5, kind: input, shape index: {}]
  %s6 = inlined_call_operand.hbm [shape: f32[32,32], index: 6, kind: output, shape index: {0}]
  %s7 = inlined_call_operand.hbm [shape: s8[32,128], index: 7, kind: output, shape index: {1}]
  %s8 = inlined_call_operand.hbm [shape: f32[1,2,8,128], index: 8, kind: output, shape index: {2}]
  %9 = xla_tuple %s6, %s7, %s8
  %s10 = sld [smem:[#allocation0]]
  $region58: #{tpu_custom_call.1} parent=0
    _
  %s12 = ssub.s32 1, %s10
  %s13 = scalar_select 0, %s12, %s10
  $region1: #{tpu_custom_call.1} parent=0
    #allocation2 [shape = 'u8[16384]{0}', space=vmem, size = 0x4000, scoped, tag = 'input window, operand 1, single buffered']
    #allocation3 [shape = 's32[1]{0}', space=sflag, size = 0x4, scoped, tag = 'scoped memory for tpu_custom_call.1']
    #allocation4 [shape = 's32[1]{0}', space=sflag, size = 0x4, scoped, tag = 'scoped memory for tpu_custom_call.1']
    #allocation5 [shape = 'u8[65536]{0}', space=vmem, size = 0x10000, scoped, tag = 'input window, operand 5, single buffered']
    #allocation6 [shape = 's32[1]{0}', space=sflag, size = 0x4, scoped, tag = 'scoped memory for tpu_custom_call.1']
    #allocation7 [shape = 'u8[16384]{0}', space=vmem, size = 0x4000, scoped, tag = 'output window, operand 0, single buffered']
    #allocation8 [shape = 'u8[4096]{0}', space=vmem, size = 0x1000, scoped, tag = 'output window, operand 1, single buffered']
    #allocation9 [shape = 's32[1]{0}', space=sflag, size = 0x4, scoped, tag = 'scoped memory for tpu_custom_call.1']
    #allocation10 [shape = 'u8[8192]{0}', space=vmem, size = 0x2000, scoped, tag = 'output window, operand 2, single buffered']
    %14 = vsyncpa [#allocation3], 0
    %15 = vsyncpa [#allocation6], 0
    %16 = vsyncpa [#allocation4], 0
    %17 = vsyncpa [#allocation9], 0
    // Predicated region
    $region2: #{tpu_custom_call.1} parent=1 // pred_check
      _
    $region3: #{tpu_custom_call.1} parent=1 // pred_check_branch
      %19 = sbr.rel (0) target = $region5
    $region4: #{tpu_custom_call.1} parent=1 // pred_region
      _
    $region5: #{tpu_custom_call.1} parent=1 // pred_fallthru
      _
    // Predicated region
    $region6: #{tpu_custom_call.1} parent=1 // pred_check
      _
    $region7: #{tpu_custom_call.1} parent=1 // pred_check_branch
      %21 = sbr.rel (0) target = $region9
    $region8: #{tpu_custom_call.1} parent=1 // pred_region
      %s23 = ssub.s32 512, 512
      %24 = vsyncadd [#allocation3], %s23
      %s25 = sshll.u32 [#allocation2], 4
      %s26 = int_to_ptr.vmem [resolvable:$true] %s25
      %31 = dma.hbm_to_vmem [thread:$0]  %s1, 512, %s26, [#allocation3], 128, 128, 8
    $region9: #{tpu_custom_call.1} parent=1 // pred_fallthru
      _
    // Predicated region
    $region10: #{tpu_custom_call.1} parent=1 // pred_check
      _
    $region11: #{tpu_custom_call.1} parent=1 // pred_check_branch
      %33 = sbr.rel (0) target = $region13
    $region12: #{tpu_custom_call.1} parent=1 // pred_region
      _
    $region13: #{tpu_custom_call.1} parent=1 // pred_fallthru
      _
    // Predicated region
    $region14: #{tpu_custom_call.1} parent=1 // pred_check
      _
    $region15: #{tpu_custom_call.1} parent=1 // pred_check_branch
      %35 = sbr.rel (0) target = $region17
    $region16: #{tpu_custom_call.1} parent=1 // pred_region
      _
    $region17: #{tpu_custom_call.1} parent=1 // pred_fallthru
      _
    // Predicated region
    $region18: #{tpu_custom_call.1} parent=1 // pred_check
      _
    $region19: #{tpu_custom_call.1} parent=1 // pred_check_branch
      %37 = sbr.rel (0) target = $region21
    $region20: #{tpu_custom_call.1} parent=1 // pred_region
      _
    $region21: #{tpu_custom_call.1} parent=1 // pred_fallthru
      _
    // Predicated region
    $region22: #{tpu_custom_call.1} parent=1 // pred_check
      _
    $region23: #{tpu_custom_call.1} parent=1 // pred_check_branch
      %39 = sbr.rel (0) target = $region25
    $region24: #{tpu_custom_call.1} parent=1 // pred_region
      %s41 = ssub.s32 2048, 2048
      %42 = vsyncadd [#allocation6], %s41
      %s43 = sshll.u32 [#allocation5], 4
      %s44 = int_to_ptr.vmem [resolvable:$true] %s43
      %49 = dma.hbm_to_vmem [thread:$0]  %s5, 2048, %s44, [#allocation6], 128, 128, 8
    $region25: #{tpu_custom_call.1} parent=1 // pred_fallthru
      _
    // Predicated region
    $region26: #{tpu_custom_call.1} parent=1 // pred_check
      _
    $region27: #{tpu_custom_call.1} parent=1 // pred_check_branch
      %51 = sbr.rel (0) target = $region29
    $region28: #{tpu_custom_call.1} parent=1 // pred_region
      %52 = dma.done [#allocation3], 512
    $region29: #{tpu_custom_call.1} parent=1 // pred_fallthru
      _
    // Predicated region
    $region30: #{tpu_custom_call.1} parent=1 // pred_check
      _
    $region31: #{tpu_custom_call.1} parent=1 // pred_check_branch
      %54 = sbr.rel (0) target = $region33
    $region32: #{tpu_custom_call.1} parent=1 // pred_region
      %55 = dma.done [#allocation6], 2048
    $region33: #{tpu_custom_call.1} parent=1 // pred_fallthru
      _
    %v58 = vld [vmem:[%s0] sm:$0xff]
    %v59 = vld [vmem:[%s0 + $0x8] sm:$0xff]
    %v60 = vld [vmem:[%s0 + $0x10] sm:$0xff]
    %v61 = vld [vmem:[%s0 + $0x18] sm:$0xff]
    %v62 = vld [vmem:[#allocation2] sm:$0xff]
    %v63 = vld [vmem:[#allocation2 + $0x8] sm:$0xff]
    %v64 = vld [vmem:[#allocation2 + $0x10] sm:$0xff]
    %v65 = vld [vmem:[#allocation2 + $0x18] sm:$0xff]
    %v66 = vld [vmem:[%s2] sm:$0x1]
    %v68 = vlaneseq
    %v69 = vshrl.u32 %v68, 7
    %v70 = vsub.s32 0, %v69
    %v71 = vrot.slane %v66, %v70
    %vm73 = vcmask 261120
    %v75 = vsel %vm73, %v58, 0
    %v78 = vsel %vm73, %v59, 0
    %v81 = vsel %vm73, %v60, 0
    %v84 = vsel %vm73, %v61, 0
    %86 = vmatprep.subr.mxu0 0.0
    %87 = vmatpush1.msra.mxu0 %v62
    %88 = vmatprep.subr.mxu0 0.0
    %89 = vmatpush1.msra.mxu0 %v63
    %90 = vmatprep.subr.mxu0 0.0
    %91 = vmatpush1.msra.mxu0 %v64
    %92 = vmatprep.subr.mxu0 0.0
    %93 = vmatpush1.msra.mxu0 %v65
    %94 = vmatprep.subr.mxu0 0.0
    %95 = vmatpush1.msra.mxu0 0.0
    %96 = vmatprep.subr.mxu0 0.0
    %97 = vmatpush1.msra.mxu0 0.0
    %98 = vmatprep.subr.mxu0 0.0
    %99 = vmatpush1.msra.mxu0 0.0
    %100 = vmatprep.subr.mxu0 0.0
    %101 = vmatpush1.msra.mxu0 0.0
    %102 = vmatprep.subr.mxu0 0.0
    %103 = vmatpush1.msra.mxu0 0.0
    %104 = vmatprep.subr.mxu0 0.0
    %105 = vmatpush1.msra.mxu0 0.0
    %106 = vmatprep.subr.mxu0 0.0
    %107 = vmatpush1.msra.mxu0 0.0
    %108 = vmatprep.subr.mxu0 0.0
    %109 = vmatpush1.msra.mxu0 0.0
    %110 = vmatprep.subr.mxu0 0.0
    %111 = vmatpush1.msra.mxu0 0.0
    %112 = vmatprep.subr.mxu0 0.0
    %113 = vmatpush1.msra.mxu0 0.0
    %114 = vmatprep.subr.mxu0 0.0
    %115 = vmatpush1.msra.mxu0 0.0
    %116 = vmatprep.subr.mxu0 0.0
    %117 = vmatpush1.msra.mxu0 0.0
    %118 = vmatprep.subr.mxu0 0.0
    %119 = vmatpush1.msra.mxu0 0.0
    %120 = vmatprep.subr.mxu0 0.0
    %121 = vmatpush1.msra.mxu0 0.0
    %122 = vmatprep.subr.mxu0 0.0
    %123 = vmatpush1.msra.mxu0 0.0
    %124 = vmatprep.subr.mxu0 0.0
    %125 = vmatpush1.msra.mxu0 0.0
    %126 = vmatprep.subr.mxu0 0.0
    %127 = vmatpush1.msra.mxu0 0.0
    %128 = vmatprep.subr.mxu0 0.0
    %129 = vmatpush1.msra.mxu0 0.0
    %130 = vmatprep.subr.mxu0 0.0
    %131 = vmatpush1.msra.mxu0 0.0
    %132 = vmatprep.subr.mxu0 0.0
    %133 = vmatpush1.msra.mxu0 0.0
    %134 = vmatprep.subr.mxu0 0.0
    %135 = vmatpush1.msra.mxu0 0.0
    %136 = vmatprep.subr.mxu0 0.0
    %137 = vmatpush1.msra.mxu0 0.0
    %138 = vmatprep.subr.mxu0 0.0
    %139 = vmatpush1.msra.mxu0 0.0
    %140 = vmatprep.subr.mxu0 0.0
    %141 = vmatpush1.msra.mxu0 0.0
    %142 = vmatprep.subr.mxu0 0.0
    %143 = vmatpush1.msra.mxu0 0.0
    %144 = vmatprep.subr.mxu0 0.0
    %145 = vmatpush1.msra.mxu0 0.0
    %146 = vmatprep.subr.mxu0 0.0
    %147 = vmatpush1.msra.mxu0 0.0
    %148 = vmatprep.subr.mxu0 0.0
    %149 = vmatpush1.msra.mxu0 0.0
    %150 = vmatprep.mubr.f32.mxu0 0.0
    %151 = vmatmul.mubr.f32.gmra.mrb[0].mxu0 %v75
    %v152 = vpop.f32.mrb[0].mxu0
    %v153 = vadd.f32 %v71, %v152
    %v154 = vpop.f32.mrb[0].mxu0
    %155 = vmatprep.mubr.f32.mxu0 0.0
    %156 = vmatmul.mubr.f32.gmra.mrb[0].mxu0 %v78
    %v157 = vpop.f32.mrb[0].mxu0
    %v158 = vadd.f32 %v71, %v157
    %v159 = vpop.f32.mrb[0].mxu0
    %160 = vmatprep.mubr.f32.mxu0 0.0
    %161 = vmatmul.mubr.f32.gmra.mrb[0].mxu0 %v81
    %v162 = vpop.f32.mrb[0].mxu0
    %v163 = vadd.f32 %v71, %v162
    %v164 = vpop.f32.mrb[0].mxu0
    %165 = vmatprep.mubr.f32.mxu0 0.0
    %166 = vmatmul.mubr.f32.gmra.mrb[0].mxu0 %v84
    %v167 = vpop.f32.mrb[0].mxu0
    %v168 = vadd.f32 %v71, %v167
    %v169 = vpop.f32.mrb[0].mxu0
    %170 = vdwg.mxu0
    %v171 = vlaneseq
    %v172 = vand.u32 %v171, 127
    %v173 = vshra.s32 %v172, 6
    %vm174 = vcmp.eq.s32.totalorder %v173, 0
    %vm175 = vcmp.eq.s32.totalorder %v173, 1
    %v176 = vsel %vm174, %v153, -inf
    %v177 = vsel %vm174, %v158, -inf
    %v178 = vsel %vm174, %v163, -inf
    %v179 = vsel %vm174, %v168, -inf
    %180 = vmax.xlane.f32.xlu0 %v176
    %v181 = vpop.xlane.xlu0 %180
    %182 = vmax.xlane.f32.xlu0 %v177
    %v183 = vpop.xlane.xlu0 %182
    %184 = vmax.xlane.f32.xlu0 %v178
    %v185 = vpop.xlane.xlu0 %184
    %186 = vmax.xlane.f32.xlu0 %v179
    %v187 = vpop.xlane.xlu0 %186
    %v188 = vsel %vm174, %v181, 0.0
    %v189 = vsel %vm174, %v183, 0.0
    %v190 = vsel %vm174, %v185, 0.0
    %v191 = vsel %vm174, %v187, 0.0
    %v192 = vsel %vm175, %v153, -inf
    %v193 = vsel %vm175, %v158, -inf
    %v194 = vsel %vm175, %v163, -inf
    %v195 = vsel %vm175, %v168, -inf
    %196 = vmax.xlane.f32.xlu0 %v192
    %v197 = vpop.xlane.xlu0 %196
    %198 = vmax.xlane.f32.xlu0 %v193
    %v199 = vpop.xlane.xlu0 %198
    %200 = vmax.xlane.f32.xlu0 %v194
    %v201 = vpop.xlane.xlu0 %200
    %202 = vmax.xlane.f32.xlu0 %v195
    %v203 = vpop.xlane.xlu0 %202
    %v204 = vsel %vm175, %v197, %v188
    %v205 = vsel %vm175, %v199, %v189
    %v206 = vsel %vm175, %v201, %v190
    %v207 = vsel %vm175, %v203, %v191
    %v208 = vsub.f32 %v153, %v204
    %v209 = vsub.f32 %v158, %v205
    %v210 = vsub.f32 %v163, %v206
    %v211 = vsub.f32 %v168, %v207
    %v212 = vmul.f32 %v208, 1.442695
    %v213 = vpow.pop %v212
    %v214 = vmul.f32 %v209, 1.442695
    %v215 = vpow.pop %v214
    %v216 = vmul.f32 %v210, 1.442695
    %v217 = vpow.pop %v216
    %v218 = vmul.f32 %v211, 1.442695
    %v219 = vpow.pop %v218
    %v220 = vld [vmem:[%s4] sm:$0xff]
    %v221 = vld [vmem:[%s4 + $0x8] sm:$0xff]
    %v222 = vld [vmem:[%s4 + $0x10] sm:$0xff]
    %v223 = vld [vmem:[%s4 + $0x18] sm:$0xff]
    %v224 = vld [vmem:[%s4 + $0x20] sm:$0xff]
    %v225 = vld [vmem:[%s4 + $0x28] sm:$0xff]
    %v226 = vld [vmem:[%s4 + $0x30] sm:$0xff]
    %v227 = vld [vmem:[%s4 + $0x38] sm:$0xff]
    %v228 = vld [vmem:[%s4 + $0x40] sm:$0xff]
    %v229 = vld [vmem:[%s4 + $0x48] sm:$0xff]
    %v230 = vld [vmem:[%s4 + $0x50] sm:$0xff]
    %v231 = vld [vmem:[%s4 + $0x58] sm:$0xff]
    %v232 = vld [vmem:[%s4 + $0x60] sm:$0xff]
    %v233 = vld [vmem:[%s4 + $0x68] sm:$0xff]
    %v234 = vld [vmem:[%s4 + $0x70] sm:$0xff]
    %v235 = vld [vmem:[%s4 + $0x78] sm:$0xff]
    %236 = vmatprep.subr.mxu0 0.0
    %237 = vmatpush1.msra.mxu0 %v220
    %238 = vmatprep.subr.mxu0 0.0
    %239 = vmatpush1.msra.mxu0 %v221
    %240 = vmatprep.subr.mxu0 0.0
    %241 = vmatpush1.msra.mxu0 %v222
    %242 = vmatprep.subr.mxu0 0.0
    %243 = vmatpush1.msra.mxu0 %v223
    %244 = vmatprep.subr.mxu0 0.0
    %245 = vmatpush1.msra.mxu0 %v224
    %246 = vmatprep.subr.mxu0 0.0
    %247 = vmatpush1.msra.mxu0 %v225
    %248 = vmatprep.subr.mxu0 0.0
    %249 = vmatpush1.msra.mxu0 %v226
    %250 = vmatprep.subr.mxu0 0.0
    %251 = vmatpush1.msra.mxu0 %v227
    %252 = vmatprep.subr.mxu0 0.0
    %253 = vmatpush1.msra.mxu0 %v228
    %254 = vmatprep.subr.mxu0 0.0
    %255 = vmatpush1.msra.mxu0 %v229
    %256 = vmatprep.subr.mxu0 0.0
    %257 = vmatpush1.msra.mxu0 %v230
    %258 = vmatprep.subr.mxu0 0.0
    %259 = vmatpush1.msra.mxu0 %v231
    %260 = vmatprep.subr.mxu0 0.0
    %261 = vmatpush1.msra.mxu0 %v232
    %262 = vmatprep.subr.mxu0 0.0
    %263 = vmatpush1.msra.mxu0 %v233
    %264 = vmatprep.subr.mxu0 0.0
    %265 = vmatpush1.msra.mxu0 %v234
    %266 = vmatprep.subr.mxu0 0.0
    %267 = vmatpush1.msra.mxu0 %v235
    %268 = vmatprep.subr.mxu0 0.0
    %269 = vmatpush1.msra.mxu0 0.0
    %270 = vmatprep.subr.mxu0 0.0
    %271 = vmatpush1.msra.mxu0 0.0
    %272 = vmatprep.subr.mxu0 0.0
    %273 = vmatpush1.msra.mxu0 0.0
    %274 = vmatprep.subr.mxu0 0.0
    %275 = vmatpush1.msra.mxu0 0.0
    %276 = vmatprep.subr.mxu0 0.0
    %277 = vmatpush1.msra.mxu0 0.0
    %278 = vmatprep.subr.mxu0 0.0
    %279 = vmatpush1.msra.mxu0 0.0
    %280 = vmatprep.subr.mxu0 0.0
    %281 = vmatpush1.msra.mxu0 0.0
    %282 = vmatprep.subr.mxu0 0.0
    %283 = vmatpush1.msra.mxu0 0.0
    %284 = vmatprep.subr.mxu0 0.0
    %285 = vmatpush1.msra.mxu0 0.0
    %286 = vmatprep.subr.mxu0 0.0
    %287 = vmatpush1.msra.mxu0 0.0
    %288 = vmatprep.subr.mxu0 0.0
    %289 = vmatpush1.msra.mxu0 0.0
    %290 = vmatprep.subr.mxu0 0.0
    %291 = vmatpush1.msra.mxu0 0.0
    %292 = vmatprep.subr.mxu0 0.0
    %293 = vmatpush1.msra.mxu0 0.0
    %294 = vmatprep.subr.mxu0 0.0
    %295 = vmatpush1.msra.mxu0 0.0
    %296 = vmatprep.subr.mxu0 0.0
    %297 = vmatpush1.msra.mxu0 0.0
    %298 = vmatprep.subr.mxu0 0.0
    %299 = vmatpush1.msra.mxu0 0.0
    %300 = vmatprep.mubr.f32.mxu0 0.0
    %301 = vmatmul.mubr.f32.gmra.mrb[0].mxu0 %v213
    %v302 = vpop.f32.mrb[0].mxu0
    %v303 = vadd.f32 0.0, %v302
    %v304 = vpop.f32.mrb[0].mxu0
    %305 = vmatprep.mubr.f32.mxu0 0.0
    %306 = vmatmul.mubr.f32.gmra.mrb[0].mxu0 %v215
    %v307 = vpop.f32.mrb[0].mxu0
    %v308 = vadd.f32 0.0, %v307
    %v309 = vpop.f32.mrb[0].mxu0
    %310 = vmatprep.mubr.f32.mxu0 0.0
    %311 = vmatmul.mubr.f32.gmra.mrb[0].mxu0 %v217
    %v312 = vpop.f32.mrb[0].mxu0
    %v313 = vadd.f32 0.0, %v312
    %v314 = vpop.f32.mrb[0].mxu0
    %315 = vmatprep.mubr.f32.mxu0 0.0
    %316 = vmatmul.mubr.f32.gmra.mrb[0].mxu0 %v219
    %v317 = vpop.f32.mrb[0].mxu0
    %v318 = vadd.f32 0.0, %v317
    %v319 = vpop.f32.mrb[0].mxu0
    %320 = vdwg.mxu0
    %v321 = vrcp.pop %v303
    %v322 = vrcp.pop %v308
    %v323 = vrcp.pop %v313
    %v324 = vrcp.pop %v318
    %v325 = vmul.f32 %v213, %v321
    %v326 = vmul.f32 %v215, %v322
    %v327 = vmul.f32 %v217, %v323
    %v328 = vmul.f32 %v219, %v324
    %vm329 = vcmp.eq.f32.partialorder %v153, %v204
    %vm330 = vcmp.eq.f32.partialorder %v158, %v205
    %vm331 = vcmp.eq.f32.partialorder %v163, %v206
    %vm332 = vcmp.eq.f32.partialorder %v168, %v207
    %v333 = vsel %vm329, 1, 0
    %v334 = vsel %vm330, 1, 0
    %v335 = vsel %vm331, 1, 0
    %v336 = vsel %vm332, 1, 0
    %v337 = vcvt.s32.f32 %v333
    %v338 = vcvt.s32.f32 %v334
    %v339 = vcvt.s32.f32 %v335
    %v340 = vcvt.s32.f32 %v336
    %v341 = vld [vmem:[#allocation5] sm:$0xff]
    %v342 = vld [vmem:[#allocation5 + $0x8] sm:$0xff]
    %v343 = vld [vmem:[#allocation5 + $0x10] sm:$0xff]
    %v344 = vld [vmem:[#allocation5 + $0x18] sm:$0xff]
    %v345 = vld [vmem:[#allocation5 + $0x20] sm:$0xff]
    %v346 = vld [vmem:[#allocation5 + $0x28] sm:$0xff]
    %v347 = vld [vmem:[#allocation5 + $0x30] sm:$0xff]
    %v348 = vld [vmem:[#allocation5 + $0x38] sm:$0xff]
    %v349 = vld [vmem:[#allocation5 + $0x40] sm:$0xff]
    %v350 = vld [vmem:[#allocation5 + $0x48] sm:$0xff]
    %v351 = vld [vmem:[#allocation5 + $0x50] sm:$0xff]
    %v352 = vld [vmem:[#allocation5 + $0x58] sm:$0xff]
    %v353 = vld [vmem:[#allocation5 + $0x60] sm:$0xff]
    %v354 = vld [vmem:[#allocation5 + $0x68] sm:$0xff]
    %v355 = vld [vmem:[#allocation5 + $0x70] sm:$0xff]
    %v356 = vld [vmem:[#allocation5 + $0x78] sm:$0xff]
    %357 = vmatprep.subr.mxu0 0.0
    %358 = vmatpush1.msra.mxu0 %v341
    %359 = vmatprep.subr.mxu0 0.0
    %360 = vmatpush1.msra.mxu0 %v342
    %361 = vmatprep.subr.mxu0 0.0
    %362 = vmatpush1.msra.mxu0 %v343
    %363 = vmatprep.subr.mxu0 0.0
    %364 = vmatpush1.msra.mxu0 %v344
    %365 = vmatprep.subr.mxu0 0.0
    %366 = vmatpush1.msra.mxu0 %v345
    %367 = vmatprep.subr.mxu0 0.0
    %368 = vmatpush1.msra.mxu0 %v346
    %369 = vmatprep.subr.mxu0 0.0
    %370 = vmatpush1.msra.mxu0 %v347
    %371 = vmatprep.subr.mxu0 0.0
    %372 = vmatpush1.msra.mxu0 %v348
    %373 = vmatprep.subr.mxu0 0.0
    %374 = vmatpush1.msra.mxu0 %v349
    %375 = vmatprep.subr.mxu0 0.0
    %376 = vmatpush1.msra.mxu0 %v350
    %377 = vmatprep.subr.mxu0 0.0
    %378 = vmatpush1.msra.mxu0 %v351
    %379 = vmatprep.subr.mxu0 0.0
    %380 = vmatpush1.msra.mxu0 %v352
    %381 = vmatprep.subr.mxu0 0.0
    %382 = vmatpush1.msra.mxu0 %v353
    %383 = vmatprep.subr.mxu0 0.0
    %384 = vmatpush1.msra.mxu0 %v354
    %385 = vmatprep.subr.mxu0 0.0
    %386 = vmatpush1.msra.mxu0 %v355
    %387 = vmatprep.subr.mxu0 0.0
    %388 = vmatpush1.msra.mxu0 %v356
    %389 = vmatprep.subr.mxu0 0.0
    %390 = vmatpush1.msra.mxu0 0.0
    %391 = vmatprep.subr.mxu0 0.0
    %392 = vmatpush1.msra.mxu0 0.0
    %393 = vmatprep.subr.mxu0 0.0
    %394 = vmatpush1.msra.mxu0 0.0
    %395 = vmatprep.subr.mxu0 0.0
    %396 = vmatpush1.msra.mxu0 0.0
    %397 = vmatprep.subr.mxu0 0.0
    %398 = vmatpush1.msra.mxu0 0.0
    %399 = vmatprep.subr.mxu0 0.0
    %400 = vmatpush1.msra.mxu0 0.0
    %401 = vmatprep.subr.mxu0 0.0
    %402 = vmatpush1.msra.mxu0 0.0
    %403 = vmatprep.subr.mxu0 0.0
    %404 = vmatpush1.msra.mxu0 0.0
    %405 = vmatprep.subr.mxu0 0.0
    %406 = vmatpush1.msra.mxu0 0.0
    %407 = vmatprep.subr.mxu0 0.0
    %408 = vmatpush1.msra.mxu0 0.0
    %409 = vmatprep.subr.mxu0 0.0
    %410 = vmatpush1.msra.mxu0 0.0
    %411 = vmatprep.subr.mxu0 0.0
    %412 = vmatpush1.msra.mxu0 0.0
    %413 = vmatprep.subr.mxu0 0.0
    %414 = vmatpush1.msra.mxu0 0.0
    %415 = vmatprep.subr.mxu0 0.0
    %416 = vmatpush1.msra.mxu0 0.0
    %417 = vmatprep.subr.mxu0 0.0
    %418 = vmatpush1.msra.mxu0 0.0
    %419 = vmatprep.subr.mxu0 0.0
    %420 = vmatpush1.msra.mxu0 0.0
    %421 = vmatprep.mubr.f32.mxu0 0.0
    %422 = vmatmul.mubr.f32.gmra.mrb[0].mxu0 %v337
    %v423 = vpop.f32.mrb[0].mxu0
    %v424 = vadd.f32 0.0, %v423
    %v425 = vpop.f32.mrb[0].mxu0
    %426 = vmatprep.mubr.f32.mxu0 0.0
    %427 = vmatmul.mubr.f32.gmra.mrb[0].mxu0 %v338
    %v428 = vpop.f32.mrb[0].mxu0
    %v429 = vadd.f32 0.0, %v428
    %v430 = vpop.f32.mrb[0].mxu0
    %431 = vmatprep.mubr.f32.mxu0 0.0
    %432 = vmatmul.mubr.f32.gmra.mrb[0].mxu0 %v339
    %v433 = vpop.f32.mrb[0].mxu0
    %v434 = vadd.f32 0.0, %v433
    %v435 = vpop.f32.mrb[0].mxu0
    %436 = vmatprep.mubr.f32.mxu0 0.0
    %437 = vmatmul.mubr.f32.gmra.mrb[0].mxu0 %v340
    %v438 = vpop.f32.mrb[0].mxu0
    %v439 = vadd.f32 0.0, %v438
    %v440 = vpop.f32.mrb[0].mxu0
    %441 = vdwg.mxu0
    %vm442 = vcmp.eq.f32.partialorder %v424, 1.0
    %vm443 = vcmp.eq.f32.partialorder %v429, 1.0
    %vm444 = vcmp.eq.f32.partialorder %v434, 1.0
    %vm445 = vcmp.eq.f32.partialorder %v439, 1.0
    %vm446 = vmand %vm329, %vm442
    %vm447 = vmand %vm330, %vm443
    %vm448 = vmand %vm331, %vm444
    %vm449 = vmand %vm332, %vm445
    %v450 = vsel %vm446, 1, 0
    %v451 = vsel %vm447, 1, 0
    %v452 = vsel %vm448, 1, 0
    %v453 = vsel %vm449, 1, 0
    %v454 = vcvt.s32.f32 %v450
    %v455 = vcvt.s32.f32 %v451
    %v456 = vcvt.s32.f32 %v452
    %v457 = vcvt.s32.f32 %v453
    %vm458 = vmpackc.low %vm447, %vm446
    %vm459 = vmpackc.low %vm449, %vm448
    %vm460 = vmpackc.even %vm459, %vm458
    %v461 = vsel %vm460, 16843009, 0
    %462 = vst [vmem:[#allocation8] sm:$0xff] %v461
    %v463 = vld [vmem:[%s3] sm:$0xff]
    %v464 = vld [vmem:[%s3 + $0x8] sm:$0xff]
    %v465 = vld [vmem:[%s3 + $0x10] sm:$0xff]
    %v466 = vld [vmem:[%s3 + $0x18] sm:$0xff]
    %v467 = vld [vmem:[%s3 + $0x20] sm:$0xff]
    %v468 = vld [vmem:[%s3 + $0x28] sm:$0xff]
    %v469 = vld [vmem:[%s3 + $0x30] sm:$0xff]
    %v470 = vld [vmem:[%s3 + $0x38] sm:$0xff]
    %v471 = vld [vmem:[%s3 + $0x40] sm:$0xff]
    %v472 = vld [vmem:[%s3 + $0x48] sm:$0xff]
    %v473 = vld [vmem:[%s3 + $0x50] sm:$0xff]
    %v474 = vld [vmem:[%s3 + $0x58] sm:$0xff]
    %v475 = vld [vmem:[%s3 + $0x60] sm:$0xff]
    %v476 = vld [vmem:[%s3 + $0x68] sm:$0xff]
    %v477 = vld [vmem:[%s3 + $0x70] sm:$0xff]
    %v478 = vld [vmem:[%s3 + $0x78] sm:$0xff]
    %479 = vmatprep.subr.mxu0 0.0
    %480 = vmatpush1.msra.mxu0 %v463
    %481 = vmatprep.subr.mxu0 0.0
    %482 = vmatpush1.msra.mxu0 %v464
    %483 = vmatprep.subr.mxu0 0.0
    %484 = vmatpush1.msra.mxu0 %v465
    %485 = vmatprep.subr.mxu0 0.0
    %486 = vmatpush1.msra.mxu0 %v466
    %487 = vmatprep.subr.mxu0 0.0
    %488 = vmatpush1.msra.mxu0 %v467
    %489 = vmatprep.subr.mxu0 0.0
    %490 = vmatpush1.msra.mxu0 %v468
    %491 = vmatprep.subr.mxu0 0.0
    %492 = vmatpush1.msra.mxu0 %v469
    %493 = vmatprep.subr.mxu0 0.0
    %494 = vmatpush1.msra.mxu0 %v470
    %495 = vmatprep.subr.mxu0 0.0
    %496 = vmatpush1.msra.mxu0 %v471
    %497 = vmatprep.subr.mxu0 0.0
    %498 = vmatpush1.msra.mxu0 %v472
    %499 = vmatprep.subr.mxu0 0.0
    %500 = vmatpush1.msra.mxu0 %v473
    %501 = vmatprep.subr.mxu0 0.0
    %502 = vmatpush1.msra.mxu0 %v474
    %503 = vmatprep.subr.mxu0 0.0
    %504 = vmatpush1.msra.mxu0 %v475
    %505 = vmatprep.subr.mxu0 0.0
    %506 = vmatpush1.msra.mxu0 %v476
    %507 = vmatprep.subr.mxu0 0.0
    %508 = vmatpush1.msra.mxu0 %v477
    %509 = vmatprep.subr.mxu0 0.0
    %510 = vmatpush1.msra.mxu0 %v478
    %511 = vmatprep.subr.mxu0 0.0
    %512 = vmatpush1.msra.mxu0 0.0
    %513 = vmatprep.subr.mxu0 0.0
    %514 = vmatpush1.msra.mxu0 0.0
    %515 = vmatprep.subr.mxu0 0.0
    %516 = vmatpush1.msra.mxu0 0.0
    %517 = vmatprep.subr.mxu0 0.0
    %518 = vmatpush1.msra.mxu0 0.0
    %519 = vmatprep.subr.mxu0 0.0
    %520 = vmatpush1.msra.mxu0 0.0
    %521 = vmatprep.subr.mxu0 0.0
    %522 = vmatpush1.msra.mxu0 0.0
    %523 = vmatprep.subr.mxu0 0.0
    %524 = vmatpush1.msra.mxu0 0.0
    %525 = vmatprep.subr.mxu0 0.0
    %526 = vmatpush1.msra.mxu0 0.0
    %527 = vmatprep.subr.mxu0 0.0
    %528 = vmatpush1.msra.mxu0 0.0
    %529 = vmatprep.subr.mxu0 0.0
    %530 = vmatpush1.msra.mxu0 0.0
    %531 = vmatprep.subr.mxu0 0.0
    %532 = vmatpush1.msra.mxu0 0.0
    %533 = vmatprep.subr.mxu0 0.0
    %534 = vmatpush1.msra.mxu0 0.0
    %535 = vmatprep.subr.mxu0 0.0
    %536 = vmatpush1.msra.mxu0 0.0
    %537 = vmatprep.subr.mxu0 0.0
    %538 = vmatpush1.msra.mxu0 0.0
    %539 = vmatprep.subr.mxu0 0.0
    %540 = vmatpush1.msra.mxu0 0.0
    %541 = vmatprep.subr.mxu0 0.0
    %542 = vmatpush1.msra.mxu0 0.0
    %543 = vmatprep.mubr.f32.mxu0 0.0
    %544 = vmatmul.mubr.f32.gmra.mrb[0].mxu0 %v454
    %v545 = vpop.f32.mrb[0].mxu0
    %v546 = vadd.f32 0.0, %v545
    %v547 = vpop.f32.mrb[0].mxu0
    %548 = vmatprep.mubr.f32.mxu0 0.0
    %549 = vmatmul.mubr.f32.gmra.mrb[0].mxu0 %v455
    %v550 = vpop.f32.mrb[0].mxu0
    %v551 = vadd.f32 0.0, %v550
    %v552 = vpop.f32.mrb[0].mxu0
    %553 = vmatprep.mubr.f32.mxu0 0.0
    %554 = vmatmul.mubr.f32.gmra.mrb[0].mxu0 %v456
    %v555 = vpop.f32.mrb[0].mxu0
    %v556 = vadd.f32 0.0, %v555
    %v557 = vpop.f32.mrb[0].mxu0
    %558 = vmatprep.mubr.f32.mxu0 0.0
    %559 = vmatmul.mubr.f32.gmra.mrb[0].mxu0 %v457
    %v560 = vpop.f32.mrb[0].mxu0
    %v561 = vadd.f32 0.0, %v560
    %v562 = vpop.f32.mrb[0].mxu0
    %563 = vdwg.mxu0
    %564 = vst.msk [vmem:[#allocation7] sm:$0xff] %vm73, %v546
    %565 = vst.msk [vmem:[#allocation7 + $0x8] sm:$0xff] %vm73, %v551
    %566 = vst.msk [vmem:[#allocation7 + $0x10] sm:$0xff] %vm73, %v556
    %567 = vst.msk [vmem:[#allocation7 + $0x18] sm:$0xff] %vm73, %v561
    %s568 = smul.u32 0, 32
    %v569 = vlaneseq
    %v570 = vshrl.u32 %v569, 7
    %v571 = vadd.s32 %v570, 8
    %v572 = vadd.s32 %v570, 16
    %v573 = vadd.s32 %v570, 24
    %v574 = vstv %s568
    %v575 = vadd.s32 %v574, %v570
    %v576 = vadd.s32 %v574, %v571
    %v577 = vadd.s32 %v574, %v572
    %v578 = vadd.s32 %v574, %v573
    %vm579 = vcmp.lt.s32.totalorder %v575, 16
    %vm580 = vcmp.lt.s32.totalorder %v576, 16
    %vm581 = vcmp.lt.s32.totalorder %v577, 16
    %vm582 = vcmp.lt.s32.totalorder %v578, 16
    %v583 = vsel %vm579, 1, 0
    %v584 = vsel %vm580, 1, 0
    %v585 = vsel %vm581, 1, 0
    %v586 = vsel %vm582, 1, 0
    %v587 = vcvt.s32.f32 %v583
    %v588 = vcvt.s32.f32 %v584
    %v589 = vcvt.s32.f32 %v585
    %v590 = vcvt.s32.f32 %v586
    %v591 = vmul.f32 %v454, %v587
    %v592 = vmul.f32 %v455, %v588
    %v593 = vmul.f32 %v456, %v589
    %v594 = vmul.f32 %v457, %v590
    %v595 = vmul.f32 %v325, %v587
    %v596 = vmul.f32 %v326, %v588
    %v597 = vmul.f32 %v327, %v589
    %v598 = vmul.f32 %v328, %v590
    %v599 = vadd.f32 %v591, %v592
    %v600 = vadd.f32 %v599, %v593
    %v601 = vadd.f32 %v600, %v594
    %602 = vst [vmem:[#allocation10] sm:$0xff] %v601
    %v603 = vadd.f32 %v595, %v596
    %v604 = vadd.f32 %v603, %v597
    %v605 = vadd.f32 %v604, %v598
    %s606 = scalar_lea.vmem [#allocation10], 8
    %607 = vst [vmem:[%s606] sm:$0xff] %v605
    // Predicated region
    $region34: #{tpu_custom_call.1} parent=1 // pred_check
      _
    $region35: #{tpu_custom_call.1} parent=1 // pred_check_branch
      %609 = sbr.rel (0) target = $region37
    $region36: #{tpu_custom_call.1} parent=1 // pred_region
      %s611 = ssub.s32 512, 512
      %612 = vsyncadd [#allocation4], %s611
      %s613 = sshll.u32 [#allocation7], 4
      %s614 = int_to_ptr.vmem [resolvable:$true] %s613
      %619 = dma.vmem_to_hbm [thread:$0]  %s614, 512, %s6, [#allocation4], 128, 128, 8
    $region37: #{tpu_custom_call.1} parent=1 // pred_fallthru
      _
    // Predicated region
    $region38: #{tpu_custom_call.1} parent=1 // pred_check
      _
    $region39: #{tpu_custom_call.1} parent=1 // pred_check_branch
      %621 = sbr.rel (0) target = $region41
    $region40: #{tpu_custom_call.1} parent=1 // pred_region
      %s623 = ssub.s32 128, 128
      %624 = vsyncadd [#allocation9], %s623
      %s626 = sshll.u32 [#allocation8], 4
      %s627 = int_to_ptr.vmem [resolvable:$true] %s626
      %629 = dma.vmem_to_hbm [thread:$0]  %s627, 128, %s7, [#allocation9]
    $region41: #{tpu_custom_call.1} parent=1 // pred_fallthru
      _
    // Predicated region
    $region42: #{tpu_custom_call.1} parent=1 // pred_check
      _
    $region43: #{tpu_custom_call.1} parent=1 // pred_check_branch
      %631 = sbr.rel (0) target = $region45
    $region44: #{tpu_custom_call.1} parent=1 // pred_region
      %s633 = ssub.s32 256, 256
      %634 = vsyncadd [#allocation9], %s633
      %s635 = sshll.u32 [#allocation10], 4
      %s636 = int_to_ptr.vmem [resolvable:$true] %s635
      %641 = dma.vmem_to_hbm [thread:$0]  %s636, 256, %s8, [#allocation9], 128, 128, 8
    $region45: #{tpu_custom_call.1} parent=1 // pred_fallthru
      _
    // Predicated region
    $region46: #{tpu_custom_call.1} parent=1 // pred_check
      _
    $region47: #{tpu_custom_call.1} parent=1 // pred_check_branch
      %643 = sbr.rel (0) target = $region49
    $region48: #{tpu_custom_call.1} parent=1 // pred_region
      %644 = dma.done [#allocation4], 512
    $region49: #{tpu_custom_call.1} parent=1 // pred_fallthru
      _
    // Predicated region
    $region50: #{tpu_custom_call.1} parent=1 // pred_check
      _
    $region51: #{tpu_custom_call.1} parent=1 // pred_check_branch
      %646 = sbr.rel (0) target = $region53
    $region52: #{tpu_custom_call.1} parent=1 // pred_region
      %647 = dma.done [#allocation9], 128
    $region53: #{tpu_custom_call.1} parent=1 // pred_fallthru
      _
    // Predicated region
    $region54: #{tpu_custom_call.1} parent=1 // pred_check
      _
    $region55: #{tpu_custom_call.1} parent=1 // pred_check_branch
      %649 = sbr.rel (0) target = $region57
    $region56: #{tpu_custom_call.1} parent=1 // pred_region
      %650 = dma.done [#allocation9], 256
    $region57: #{tpu_custom_call.1} parent=1 // pred_fallthru
      _
    %651 = vsyncpa [#allocation3], 1
    %652 = vsyncpa [#allocation6], 1
    %653 = vsyncpa [#allocation4], 1
    %654 = vsyncpa [#allocation9], 1

</llo_original>
